<compile_context>
chip_gen: v5e
topology: v5e:2x2
jax: 0.10.0
libtpu: 0.0.40
codegen_flags: <defaults>
</compile_context>

<pallas_src>
import jax
import jax.numpy as jnp
from jax.experimental import pallas as pl
from jax.experimental.pallas import tpu as pltpu


# ----------------------------------------------------------------------------
# Fused kernel: out = x @ W^T + b   (one MXU dot, f32 accumulate, fused bias)
# ----------------------------------------------------------------------------
def _linear_kernel(x_ref, wt_ref, b_ref, o_ref):
    o_ref[...] = (
        jnp.dot(x_ref[...], wt_ref[...], preferred_element_type=jnp.float32)
        + b_ref[...]
    ).astype(o_ref.dtype)


# ----------------------------------------------------------------------------
# Parameter handling.
# ----------------------------------------------------------------------------
def init_params(key, input_dim, out_dim):
    """PyTorch nn.Linear-like init; W stored in torch layout (O, D)."""
    kw, kb = jax.random.split(key, 2)
    scale = 1.0 / jnp.sqrt(input_dim)
    return {
        "w": jax.random.uniform(kw, (out_dim, input_dim), jnp.float32,
                                -scale, scale),
        "b": jax.random.uniform(kb, (out_dim,), jnp.float32, -scale, scale),
    }


def prepare_params(raw):
    """Hoist all per-call layout work (transpose, bias reshape) to init time."""
    w = raw["w"]                               # (O, D)
    b = raw["b"]                               # (O,)
    return {
        "w_t": jnp.transpose(w, (1, 0)),       # (D, O) — MXU-friendly
        "b2": b.reshape(1, -1),                # (1, O)
    }


# ----------------------------------------------------------------------------
# Forward.
# ----------------------------------------------------------------------------
def linear_regression_forward(params, x, *, block_rows=512):
    """LinearRegression forward: Linear(x.squeeze()).

    params: output of prepare_params (pre-transposed weight, 2-D bias).
    x: arbitrary-rank input; all size-1 dims are squeezed away (torch
       semantics), then a (B, D) @ (D, O) + b linear is applied.
    """
    x_sq = jnp.squeeze(x)                      # static shape plumbing
    was_1d = x_sq.ndim == 1
    x2 = x_sq[None, :] if was_1d else x_sq     # (B, D)

    B, D = x2.shape
    w_t = params["w_t"]                        # (D, O)
    b2 = params["b2"]                          # (1, O)
    O = w_t.shape[1]

    if B <= block_rows:
        # --- small batch: single full-block invocation, no grid -------------
        out = pl.pallas_call(
            _linear_kernel,
            out_shape=jax.ShapeDtypeStruct((B, O), x2.dtype),
            in_specs=[
                pl.BlockSpec((B, D), lambda: (0, 0)),
                pl.BlockSpec((D, O), lambda: (0, 0)),
                pl.BlockSpec((1, O), lambda: (0, 0)),
            ],
            out_specs=pl.BlockSpec((B, O), lambda: (0, 0)),
        )(x2, w_t, b2)
    else:
        # --- large (stacked/federated) batch: grid over rows ----------------
        tb = block_rows                        # multiple of 8, >=512 rows
        num_blocks = -(-B // tb)
        Bp = num_blocks * tb
        x2p = jnp.pad(x2, ((0, Bp - B), (0, 0))) if Bp != B else x2

        out = pl.pallas_call(
            _linear_kernel,
            out_shape=jax.ShapeDtypeStruct((Bp, O), x2.dtype),
            grid=(num_blocks,),
            in_specs=[
                pl.BlockSpec((tb, D), lambda i: (i, 0)),
                pl.BlockSpec((D, O), lambda i: (0, 0)),   # weight resident
                pl.BlockSpec((1, O), lambda i: (0, 0)),   # bias resident
            ],
            out_specs=pl.BlockSpec((tb, O), lambda i: (i, 0)),
            compiler_params=pltpu.CompilerParams(
                dimension_semantics=("parallel",)),        # v7x: 2 TCs
        )(x2p, w_t, b2)
        out = out[:B]

    return out[0] if was_1d else out


# ----------------------------------------------------------------------------
# Pure-JAX reference (uses the raw torch-layout params).
# ----------------------------------------------------------------------------
def _model_ref(raw_params, x):
    x_sq = jnp.squeeze(x)
    return x_sq @ raw_params["w"].T + raw_params["b"]


if __name__ == "__main__":
    key = jax.random.PRNGKey(0)
    k_par, k_x1, k_x2 = jax.random.split(key, 3)

    D, O = 16, 4
    raw = init_params(k_par, D, O)
    params = prepare_params(raw)               # transpose hoisted here, once

    fwd = jax.jit(linear_regression_forward)

    # Case 1: tiny batch with an extra size-1 dim (exercises x.squeeze(),
    # single-block path).
    x_small = jax.random.normal(k_x1, (2, 1, D), jnp.float32)
    out_small = jax.block_until_ready(fwd(params, x_small))
    ref_small = _model_ref(raw, x_small)
    assert out_small.shape == (2, O), out_small.shape
    assert jnp.allclose(out_small, ref_small, atol=1e-5, rtol=1e-5)

    # Case 2: stacked batch (FedGCC-style amortization) — exercises the
    # row-gridded path with a non-multiple-of-tile batch and padding.
    B2 = 1300
    x_big = jax.random.normal(k_x2, (B2, 1, D), jnp.float32)
    out_big = jax.block_until_ready(fwd(params, x_big))
    ref_big = _model_ref(raw, x_big)
    assert out_big.shape == (B2, O), out_big.shape
    assert jnp.allclose(out_big, ref_big, atol=1e-4, rtol=1e-4)

    print("KERNEL_OK")
</pallas_src>

<mosaic_0001>
module attributes {stable_mosaic.version = 11 : i64} {
  func.func @_linear_kernel(%arg0: memref<2x16xf32, #tpu.memory_space<vmem>>, %arg1: memref<16x4xf32, #tpu.memory_space<vmem>>, %arg2: memref<1x4xf32, #tpu.memory_space<vmem>>, %arg3: memref<2x4xf32, #tpu.memory_space<vmem>>) attributes {dimension_semantics = [], scalar_prefetch = 0 : i64, scratch_operands = 0 : i64, tpu.core_type = #tpu.core_type<tc>} {
    %c0 = arith.constant 0 : index
    %c0_0 = arith.constant 0 : index
    %0 = vector.load %arg0[%c0, %c0_0] : memref<2x16xf32, #tpu.memory_space<vmem>>, vector<2x16xf32>
    %c0_1 = arith.constant 0 : index
    %c0_2 = arith.constant 0 : index
    %1 = vector.load %arg1[%c0_1, %c0_2] : memref<16x4xf32, #tpu.memory_space<vmem>>, vector<16x4xf32>
    %cst = arith.constant dense<0.000000e+00> : vector<2x4xf32>
    %2 = tpu.matmul %0, %1, %cst {dimension_numbers = #tpu.dot_dimension_numbers<[1], [0], [0], [1], [0, 0, 1, 1], [], []>} : vector<2x16xf32>, vector<16x4xf32>, vector<2x4xf32> -> vector<2x4xf32>
    %c0_3 = arith.constant 0 : index
    %c0_4 = arith.constant 0 : index
    %3 = vector.load %arg2[%c0_3, %c0_4] : memref<1x4xf32, #tpu.memory_space<vmem>>, vector<1x4xf32>
    %4 = vector.broadcast %3 : vector<1x4xf32> to vector<2x4xf32>
    %5 = arith.addf %2, %4 : vector<2x4xf32>
    %c0_5 = arith.constant 0 : index
    %c0_6 = arith.constant 0 : index
    %6 = vector.load %arg3[%c0_5, %c0_6] : memref<2x4xf32, #tpu.memory_space<vmem>>, vector<2x4xf32>
    tpu.vector_store %arg3[%c0_5, %c0_6], %5 {strides = array<i32>} : memref<2x4xf32, #tpu.memory_space<vmem>>, vector<2x4xf32>,
    return
  }
}

</mosaic_0001>

<llo_original>
// kernel: linear_regression_forward.1
$region0: #{linear_regression_forward.1}
  #allocation0 [shape = 'u32[]', space=smem, size = 0x4, offset = 0x4, fixed_abs, tag = 'smem constant byte address 0x4 - core index']
  #allocation1 [shape = 'u32[72,128]{1,0:T(1,128)}', space=vmem, size = 0x9000, scoped, tag = 'internal scratch']
  %s0 = inlined_call_operand.vmem [shape: f32[2,16], index: 0, kind: input, shape index: {}]
  %s1 = inlined_call_operand.vmem [shape: f32[16,4], index: 1, kind: input, shape index: {}]
  %s2 = inlined_call_operand.vmem [shape: f32[1,4], index: 2, kind: input, shape index: {}]
  %s3 = inlined_call_operand.hbm [shape: f32[2,4], index: 3, kind: output, shape index: {}]
  %s4 = sld [smem:[#allocation0]]
  $region22: #{linear_regression_forward.1} parent=0
    _
  %s6 = ssub.s32 1, %s4
  %s7 = scalar_select 0, %s6, %s4
  $region1: #{linear_regression_forward.1} parent=0
    #allocation2 [shape = 'u8[1024]{0}', space=vmem, size = 0x400, scoped, tag = 'output window, operand 0, single buffered']
    #allocation3 [shape = 's32[1]{0}', space=sflag, size = 0x4, scoped, tag = 'scoped memory for linear_regression_forward.1']
    %8 = vsyncpa [#allocation3], 0
    // Predicated region
    $region2: #{linear_regression_forward.1} parent=1 // pred_check
      _
    $region3: #{linear_regression_forward.1} parent=1 // pred_check_branch
      %10 = sbr.rel (0) target = $region5
    $region4: #{linear_regression_forward.1} parent=1 // pred_region
      _
    $region5: #{linear_regression_forward.1} parent=1 // pred_fallthru
      _
    // Predicated region
    $region6: #{linear_regression_forward.1} parent=1 // pred_check
      _
    $region7: #{linear_regression_forward.1} parent=1 // pred_check_branch
      %12 = sbr.rel (0) target = $region9
    $region8: #{linear_regression_forward.1} parent=1 // pred_region
      _
    $region9: #{linear_regression_forward.1} parent=1 // pred_fallthru
      _
    // Predicated region
    $region10: #{linear_regression_forward.1} parent=1 // pred_check
      _
    $region11: #{linear_regression_forward.1} parent=1 // pred_check_branch
      %14 = sbr.rel (0) target = $region13
    $region12: #{linear_regression_forward.1} parent=1 // pred_region
      _
    $region13: #{linear_regression_forward.1} parent=1 // pred_fallthru
      _
    %v15 = vld [vmem:[%s0] sm:$0x3]
    %v16 = vld [vmem:[%s1] sm:$0xff]
    %v17 = vld [vmem:[%s1 + $0x8] sm:$0xff]
    %v18 = vld [vmem:[%s2] sm:$0x1]
    %v20 = vperm.slane %v18, 0
    %vm22 = vcmask 130048
    %v24 = vsel %vm22, %v15, 0
    %26 = vmatpush.msra.mxu0 0.0
    %27 = vmatpush.msra.mxu0 0.0
    %28 = vmatpush.msra.mxu0 0.0
    %29 = vmatpush.msra.mxu0 0.0
    %30 = vmatpush.msra.mxu0 0.0
    %31 = vmatpush.msra.mxu0 0.0
    %32 = vmatpush.msra.mxu0 0.0
    %33 = vmatpush.msra.mxu0 0.0
    %34 = vmatpush.msra.mxu0 0.0
    %35 = vmatpush.msra.mxu0 0.0
    %36 = vmatpush.msra.mxu0 0.0
    %37 = vmatpush.msra.mxu0 0.0
    %38 = vmatpush.msra.mxu0 0.0
    %39 = vmatpush.msra.mxu0 0.0
    %40 = vmatpush.msra.mxu0 %v17
    %41 = vmatpush.msra.mxu0 %v16
    %42 = vmatmul.f32.gmra.mxu0 %v24
    %v43 = vpop.f32.mrf.mxu0
    %v44 = vadd.f32 %v20, %v43
    %45 = vdwg.mxu0
    %vm46 = vcmask 25600
    %47 = vst.msk [vmem:[#allocation2] sm:$0x3] %vm46, %v44
    // Predicated region
    $region14: #{linear_regression_forward.1} parent=1 // pred_check
      _
    $region15: #{linear_regression_forward.1} parent=1 // pred_check_branch
      %49 = sbr.rel (0) target = $region17
    $region16: #{linear_regression_forward.1} parent=1 // pred_region
      %51 = vsyncadd [#allocation3], 0
      %s53 = sshll.u32 [#allocation2], 4
      %s54 = int_to_ptr.vmem [resolvable:$true] %s53
      %s55 = sshll.u32 %s3, 4
      %s56 = int_to_ptr.hbm [resolvable:$true] %s55
      %58 = dma.vmem_to_hbm [thread:$0]  %s54, 32, %s56, [#allocation3]
    $region17: #{linear_regression_forward.1} parent=1 // pred_fallthru
      _
    // Predicated region
    $region18: #{linear_regression_forward.1} parent=1 // pred_check
      _
    $region19: #{linear_regression_forward.1} parent=1 // pred_check_branch
      %60 = sbr.rel (0) target = $region21
    $region20: #{linear_regression_forward.1} parent=1 // pred_region
      %62 = dma.done [#allocation3], 32
    $region21: #{linear_regression_forward.1} parent=1 // pred_fallthru
      _
    %63 = vsyncpa [#allocation3], 1

</llo_original>
